<compile_context>
chip_gen: v6e
topology: v6e:2x2x1
jax: 0.10.0
libtpu: 0.0.40
codegen_flags: <defaults>
</compile_context>

<pallas_src>
from functools import partial

import jax
import jax.numpy as jnp
from jax.experimental import pallas as pl
from jax.experimental.pallas import tpu as pltpu


def _cdiv(a, b):
    return (a + b - 1) // b


def _round_up(x, m):
    return _cdiv(x, m) * m


def policy_kernel(x_ref, w1_ref, b1_ref, w2_ref, b2_ref, wh_ref, bh_ref,
                  out_ref):
    # x arrives in f32; cast to bf16 in-kernel (VPU, hidden under the MXU).
    x = x_ref[...].astype(w1_ref.dtype)

    # hidden layer 1: Linear + ReLU (bf16 operands, f32 accumulation)
    h = jnp.dot(x, w1_ref[...],
                preferred_element_type=jnp.float32) + b1_ref[...]
    h = jnp.maximum(h, 0.0)

    # hidden layer 2: Linear + ReLU
    h = jnp.dot(h.astype(w2_ref.dtype), w2_ref[...],
                preferred_element_type=jnp.float32) + b2_ref[...]
    h = jnp.maximum(h, 0.0)

    # fused heads [mu | value | 0-pad]: one matmul, one lane-dense 128-wide store
    out_ref[...] = jnp.dot(h.astype(wh_ref.dtype), wh_ref[...],
                           preferred_element_type=jnp.float32) + bh_ref[...]


def prepare_policy_params(params, compute_dtype=jnp.bfloat16):
    """One-time preprocessing: fuse mu/value heads, zero-pad head to 128 lanes,
    cast weights to bf16, keep biases f32, hoist std = exp(logstd).
    Returns (prepared_dict, act_dim)."""
    w1, b1, w2, b2, wmu, bmu, logstd, wv, bv = params
    d2, act_dim = wmu.shape
    nh = act_dim + 1
    NH = max(128, _round_up(nh, 128))  # lane-dense head width

    wh = jnp.concatenate([wmu, wv], axis=1)               # [d2, nh]
    bh = jnp.concatenate([bmu, bv], axis=0)                # [nh]
    wh = jnp.pad(wh, ((0, 0), (0, NH - nh)))               # [d2, NH], pad cols = 0
    bh = jnp.pad(bh, (0, NH - nh))                         # [NH],     pad      = 0

    prepared = dict(
        w1=w1.astype(compute_dtype),
        b1=b1.reshape(1, -1).astype(jnp.float32),
        w2=w2.astype(compute_dtype),
        b2=b2.reshape(1, -1).astype(jnp.float32),
        wh=wh.astype(compute_dtype),
        bh=bh.reshape(1, -1).astype(jnp.float32),
        std=jnp.exp(logstd).astype(jnp.float32),           # x-independent
    )
    return prepared, int(act_dim)


def _pick_block_b(B, block_b):
    # Always tiled; bb is a multiple of 8 (sublane), ragged last block is fine
    # because batch rows are independent.
    bb = min(block_b, _round_up(B, 8))
    # At medium/large B make sure there are >= 2 grid steps so v7x's second
    # TensorCore gets work; at small B keep a single latency-bound step.
    if B >= 256 and _cdiv(B, bb) < 2:
        bb = _round_up(_cdiv(B, 2), 8)
    return max(bb, 8)


@partial(jax.jit, static_argnames=("act_dim", "block_b"))
def policy_net_forward(x, prepared, act_dim, block_b=1024):
    """Returns (mu [B, act], std [act], value [B]) matching PolicyNet.forward."""
    w1, b1 = prepared["w1"], prepared["b1"]
    w2, b2 = prepared["w2"], prepared["b2"]
    wh, bh = prepared["wh"], prepared["bh"]
    std = prepared["std"]

    B, obs_dim = x.shape
    d1 = w1.shape[1]
    d2 = w2.shape[1]
    NH = wh.shape[1]

    bb = _pick_block_b(B, block_b)
    grid = (_cdiv(B, bb),)

    flops = 2 * B * (obs_dim * d1 + d1 * d2 + d2 * NH)
    bytes_accessed = (
        x.size * x.dtype.itemsize
        + w1.size * w1.dtype.itemsize
        + w2.size * w2.dtype.itemsize
        + wh.size * wh.dtype.itemsize
        + (b1.size + b2.size + bh.size) * 4
        + B * NH * 4
    )
    cost = pl.CostEstimate(flops=flops, transcendentals=0,
                           bytes_accessed=bytes_accessed)

    in_specs = [
        pl.BlockSpec((bb, obs_dim), lambda i: (i, 0)),     # x: batch-tiled (f32)
        pl.BlockSpec((obs_dim, d1), lambda i: (0, 0)),     # weights stay resident
        pl.BlockSpec((1, d1), lambda i: (0, 0)),
        pl.BlockSpec((d1, d2), lambda i: (0, 0)),
        pl.BlockSpec((1, d2), lambda i: (0, 0)),
        pl.BlockSpec((d2, NH), lambda i: (0, 0)),
        pl.BlockSpec((1, NH), lambda i: (0, 0)),
    ]
    out_specs = pl.BlockSpec((bb, NH), lambda i: (i, 0))

    fused_out = pl.pallas_call(
        policy_kernel,
        out_shape=jax.ShapeDtypeStruct((B, NH), jnp.float32),
        grid=grid,
        in_specs=in_specs,
        out_specs=out_specs,
        compiler_params=pltpu.CompilerParams(
            dimension_semantics=("parallel",),
            vmem_limit_bytes=32 * 1024 * 1024,
        ),
        cost_estimate=cost,
    )(x, w1, b1, w2, b2, wh, bh)

    mu = fused_out[:, :act_dim]
    value = fused_out[:, act_dim]
    return mu, std, value


def init_params(key, obs_dim, act_dim, hidden=(256, 256)):
    """Deterministic synthetic init (uniform, scaled like PyTorch Linear)."""
    keys = jax.random.split(key, 8)
    d1, d2 = hidden

    def lin(kw, kb, fan_in, fan_out):
        bound = 1.0 / jnp.sqrt(fan_in)
        w = jax.random.uniform(kw, (fan_in, fan_out), jnp.float32, -bound, bound)
        b = jax.random.uniform(kb, (fan_out,), jnp.float32, -bound, bound)
        return w, b

    w1, b1 = lin(keys[0], keys[1], obs_dim, d1)
    w2, b2 = lin(keys[2], keys[3], d1, d2)
    wmu, bmu = lin(keys[4], keys[5], d2, act_dim)
    wv, bv = lin(keys[6], keys[7], d2, 1)
    logstd = jnp.zeros((act_dim,), jnp.float32)  # nn.Parameter(torch.zeros(act_dim))
    return (w1, b1, w2, b2, wmu, bmu, logstd, wv, bv)


def reference_forward(x, params):
    """Pure-JAX f32 reference (ground truth)."""
    w1, b1, w2, b2, wmu, bmu, logstd, wv, bv = params
    h = jnp.maximum(x @ w1 + b1, 0.0)
    h = jnp.maximum(h @ w2 + b2, 0.0)
    mu = h @ wmu + bmu
    std = jnp.exp(logstd)
    value = (h @ wv + bv).squeeze(-1)
    return mu, std, value


if __name__ == "__main__":
    key = jax.random.PRNGKey(0)
    k_param, k_x = jax.random.split(key)

    B, obs_dim, act_dim = 8, 16, 8
    hidden = (256, 256)

    params = init_params(k_param, obs_dim, act_dim, hidden)
    x = jax.random.normal(k_x, (B, obs_dim), jnp.float32)

    # One-time preprocessing (fuse heads, pad to 128 lanes, cast to bf16).
    prepared, act_dim_p = prepare_policy_params(params)

    mu, std, value = policy_net_forward(x, prepared, act_dim=act_dim_p)
    jax.block_until_ready((mu, std, value))

    mu_ref, std_ref, value_ref = reference_forward(x, params)
    assert mu.shape == (B, act_dim) and std.shape == (act_dim,) and value.shape == (B,)
    # bf16 compute inside the kernel -> looser tolerance vs. the f32 reference.
    assert jnp.allclose(mu, mu_ref, atol=2e-2, rtol=2e-2)
    assert jnp.allclose(std, std_ref, atol=1e-6, rtol=1e-6)
    assert jnp.allclose(value, value_ref, atol=2e-2, rtol=2e-2)

    print("KERNEL_OK")
</pallas_src>

<mosaic_0001>
module attributes {stable_mosaic.version = 11 : i64} {
  func.func @policy_kernel(%arg0: i32, %arg1: memref<8x16xf32, #tpu.memory_space<vmem>>, %arg2: memref<16x256xbf16, #tpu.memory_space<vmem>>, %arg3: memref<1x256xf32, #tpu.memory_space<vmem>>, %arg4: memref<256x256xbf16, #tpu.memory_space<vmem>>, %arg5: memref<1x256xf32, #tpu.memory_space<vmem>>, %arg6: memref<256x128xbf16, #tpu.memory_space<vmem>>, %arg7: memref<1x128xf32, #tpu.memory_space<vmem>>, %arg8: memref<8x128xf32, #tpu.memory_space<vmem>>) attributes {dimension_semantics = [#tpu.dimension_semantics<parallel>], iteration_bounds = array<i64: 1>, scalar_prefetch = 0 : i64, scratch_operands = 0 : i64, tpu.core_type = #tpu.core_type<tc>, window_params = [{transform_indices = @transform_0, window_bounds = array<i64: 8, 16>}, {pipeline_mode = #tpu.pipeline_mode<synchronous>, transform_indices = @transform_1, window_bounds = array<i64: 16, 256>}, {pipeline_mode = #tpu.pipeline_mode<synchronous>, transform_indices = @transform_2, window_bounds = array<i64: 1, 256>}, {pipeline_mode = #tpu.pipeline_mode<synchronous>, transform_indices = @transform_3, window_bounds = array<i64: 256, 256>}, {pipeline_mode = #tpu.pipeline_mode<synchronous>, transform_indices = @transform_4, window_bounds = array<i64: 1, 256>}, {pipeline_mode = #tpu.pipeline_mode<synchronous>, transform_indices = @transform_5, window_bounds = array<i64: 256, 128>}, {pipeline_mode = #tpu.pipeline_mode<synchronous>, transform_indices = @transform_6, window_bounds = array<i64: 1, 128>}, {transform_indices = @transform_7, window_bounds = array<i64: 8, 128>}]} {
    %c0 = arith.constant 0 : index
    %c0_0 = arith.constant 0 : index
    %0 = vector.load %arg1[%c0, %c0_0] : memref<8x16xf32, #tpu.memory_space<vmem>>, vector<8x16xf32>
    %1 = arith.truncf %0 : vector<8x16xf32> to vector<8x16xbf16>
    %c0_1 = arith.constant 0 : index
    %c0_2 = arith.constant 0 : index
    %2 = vector.load %arg2[%c0_1, %c0_2] : memref<16x256xbf16, #tpu.memory_space<vmem>>, vector<16x256xbf16>
    %cst = arith.constant dense<0.000000e+00> : vector<8x256xf32>
    %3 = tpu.matmul %1, %2, %cst {dimension_numbers = #tpu.dot_dimension_numbers<[1], [0], [0], [1], [0, 0, 1, 1], [], []>} : vector<8x16xbf16>, vector<16x256xbf16>, vector<8x256xf32> -> vector<8x256xf32>
    %c0_3 = arith.constant 0 : index
    %c0_4 = arith.constant 0 : index
    %4 = vector.load %arg3[%c0_3, %c0_4] : memref<1x256xf32, #tpu.memory_space<vmem>>, vector<1x256xf32>
    %5 = vector.broadcast %4 : vector<1x256xf32> to vector<8x256xf32>
    %6 = arith.addf %3, %5 : vector<8x256xf32>
    %cst_5 = arith.constant 0.000000e+00 : f32
    %7 = vector.broadcast %cst_5 : f32 to vector<8x256xf32>
    %8 = arith.maximumf %6, %7 : vector<8x256xf32>
    %9 = arith.truncf %8 : vector<8x256xf32> to vector<8x256xbf16>
    %c0_6 = arith.constant 0 : index
    %c0_7 = arith.constant 0 : index
    %10 = vector.load %arg4[%c0_6, %c0_7] : memref<256x256xbf16, #tpu.memory_space<vmem>>, vector<256x256xbf16>
    %cst_8 = arith.constant dense<0.000000e+00> : vector<8x256xf32>
    %11 = tpu.matmul %9, %10, %cst_8 {dimension_numbers = #tpu.dot_dimension_numbers<[1], [0], [0], [1], [0, 0, 1, 1], [], []>} : vector<8x256xbf16>, vector<256x256xbf16>, vector<8x256xf32> -> vector<8x256xf32>
    %c0_9 = arith.constant 0 : index
    %c0_10 = arith.constant 0 : index
    %12 = vector.load %arg5[%c0_9, %c0_10] : memref<1x256xf32, #tpu.memory_space<vmem>>, vector<1x256xf32>
    %13 = vector.broadcast %12 : vector<1x256xf32> to vector<8x256xf32>
    %14 = arith.addf %11, %13 : vector<8x256xf32>
    %cst_11 = arith.constant 0.000000e+00 : f32
    %15 = vector.broadcast %cst_11 : f32 to vector<8x256xf32>
    %16 = arith.maximumf %14, %15 : vector<8x256xf32>
    %17 = arith.truncf %16 : vector<8x256xf32> to vector<8x256xbf16>
    %c0_12 = arith.constant 0 : index
    %c0_13 = arith.constant 0 : index
    %18 = vector.load %arg6[%c0_12, %c0_13] : memref<256x128xbf16, #tpu.memory_space<vmem>>, vector<256x128xbf16>
    %cst_14 = arith.constant dense<0.000000e+00> : vector<8x128xf32>
    %19 = tpu.matmul %17, %18, %cst_14 {dimension_numbers = #tpu.dot_dimension_numbers<[1], [0], [0], [1], [0, 0, 1, 1], [], []>} : vector<8x256xbf16>, vector<256x128xbf16>, vector<8x128xf32> -> vector<8x128xf32>
    %c0_15 = arith.constant 0 : index
    %c0_16 = arith.constant 0 : index
    %20 = vector.load %arg7[%c0_15, %c0_16] : memref<1x128xf32, #tpu.memory_space<vmem>>, vector<1x128xf32>
    %21 = vector.broadcast %20 : vector<1x128xf32> to vector<8x128xf32>
    %22 = arith.addf %19, %21 : vector<8x128xf32>
    %c0_17 = arith.constant 0 : index
    %c0_18 = arith.constant 0 : index
    %23 = vector.load %arg8[%c0_17, %c0_18] : memref<8x128xf32, #tpu.memory_space<vmem>>, vector<8x128xf32>
    tpu.vector_store %arg8[%c0_17, %c0_18], %22 {strides = array<i32>} : memref<8x128xf32, #tpu.memory_space<vmem>>, vector<8x128xf32>,
    return
  }
  func.func @transform_0(%arg0: i32) -> (i32, i32) {
    %c0_i32 = arith.constant 0 : i32
    %c0_i32_0 = arith.constant 0 : i32
    return %arg0, %c0_i32 : i32, i32
  }
  func.func @transform_1(%arg0: i32) -> (i32, i32) {
    %c0_i32 = arith.constant 0 : i32
    %c0_i32_0 = arith.constant 0 : i32
    %c0_i32_1 = arith.constant 0 : i32
    return %c0_i32, %c0_i32_0 : i32, i32
  }
  func.func @transform_2(%arg0: i32) -> (i32, i32) {
    %c0_i32 = arith.constant 0 : i32
    %c0_i32_0 = arith.constant 0 : i32
    %c0_i32_1 = arith.constant 0 : i32
    return %c0_i32, %c0_i32_0 : i32, i32
  }
  func.func @transform_3(%arg0: i32) -> (i32, i32) {
    %c0_i32 = arith.constant 0 : i32
    %c0_i32_0 = arith.constant 0 : i32
    %c0_i32_1 = arith.constant 0 : i32
    return %c0_i32, %c0_i32_0 : i32, i32
  }
  func.func @transform_4(%arg0: i32) -> (i32, i32) {
    %c0_i32 = arith.constant 0 : i32
    %c0_i32_0 = arith.constant 0 : i32
    %c0_i32_1 = arith.constant 0 : i32
    return %c0_i32, %c0_i32_0 : i32, i32
  }
  func.func @transform_5(%arg0: i32) -> (i32, i32) {
    %c0_i32 = arith.constant 0 : i32
    %c0_i32_0 = arith.constant 0 : i32
    %c0_i32_1 = arith.constant 0 : i32
    return %c0_i32, %c0_i32_0 : i32, i32
  }
  func.func @transform_6(%arg0: i32) -> (i32, i32) {
    %c0_i32 = arith.constant 0 : i32
    %c0_i32_0 = arith.constant 0 : i32
    %c0_i32_1 = arith.constant 0 : i32
    return %c0_i32, %c0_i32_0 : i32, i32
  }
  func.func @transform_7(%arg0: i32) -> (i32, i32) {
    %c0_i32 = arith.constant 0 : i32
    %c0_i32_0 = arith.constant 0 : i32
    return %arg0, %c0_i32 : i32, i32
  }
}

</mosaic_0001>

<llo_original>
// kernel: policy_net_forward.1
$region0: #{policy_net_forward.1}
  #allocation0 [shape = 'u32[]', space=smem, size = 0x4, offset = 0x4, fixed_abs, tag = 'smem constant byte address 0x4 - core index']
  #allocation1 [shape = 'u32[144,128]{1,0:T(1,128)}', space=vmem, size = 0x12000, scoped, tag = 'internal scratch']
  %s0 = inlined_call_operand.hbm [shape: f32[8,16], index: 0, kind: input, shape index: {}]
  %s1 = inlined_call_operand.hbm [shape: bf16[16,256], index: 1, kind: input, shape index: {}]
  %s2 = inlined_call_operand.hbm [shape: f32[1,256], index: 2, kind: input, shape index: {}]
  %s3 = inlined_call_operand.hbm [shape: bf16[256,256], index: 3, kind: input, shape index: {}]
  %s4 = inlined_call_operand.vmem [shape: f32[1,256], index: 4, kind: input, shape index: {}]
  %s5 = inlined_call_operand.hbm [shape: bf16[256,128], index: 5, kind: input, shape index: {}]
  %s6 = inlined_call_operand.vmem [shape: f32[1,128], index: 6, kind: input, shape index: {}]
  %s7 = inlined_call_operand.vmem [shape: f32[8,128], index: 7, kind: output, shape index: {}]
  %s8 = sld [smem:[#allocation0]]
  $region58: #{policy_net_forward.1} parent=0
    _
  %s10 = ssub.s32 1, %s8
  %s11 = scalar_select 0, %s10, %s8
  $region1: #{policy_net_forward.1} parent=0
    #allocation2 [shape = 'u8[4096]{0}', space=vmem, size = 0x1000, scoped, tag = 'input window, operand 0, single buffered']
    #allocation3 [shape = 's32[1]{0}', space=sflag, size = 0x4, scoped, tag = 'scoped memory for policy_net_forward.1']
    #allocation4 [shape = 'u8[8192]{0}', space=vmem, size = 0x2000, scoped, tag = 'input window, operand 1, single buffered']
    #allocation5 [shape = 's32[1]{0}', space=sflag, size = 0x4, scoped, tag = 'scoped memory for policy_net_forward.1']
    #allocation6 [shape = 'u8[1024]{0}', space=vmem, size = 0x400, scoped, tag = 'input window, operand 2, single buffered']
    #allocation7 [shape = 'u8[131072]{0}', space=vmem, size = 0x20000, scoped, tag = 'input window, operand 3, single buffered']
    #allocation8 [shape = 's32[1]{0}', space=sflag, size = 0x4, scoped, tag = 'scoped memory for policy_net_forward.1']
    #allocation9 [shape = 'u8[65536]{0}', space=vmem, size = 0x10000, scoped, tag = 'input window, operand 5, single buffered']
    %12 = vsyncpa [#allocation3], 0
    %13 = vsyncpa [#allocation5], 0
    %14 = vsyncpa [#allocation8], 0
    // Predicated region
    $region2: #{policy_net_forward.1} parent=1 // pred_check
      _
    $region3: #{policy_net_forward.1} parent=1 // pred_check_branch
      %16 = sbr.rel (0) target = $region5
    $region4: #{policy_net_forward.1} parent=1 // pred_region
      %s18 = ssub.s32 128, 128
      %19 = vsyncadd [#allocation3], %s18
      %s21 = sshll.u32 [#allocation2], 4
      %s22 = int_to_ptr.vmem [resolvable:$true] %s21
      %24 = dma.hbm_to_vmem [thread:$0]  %s0, 128, %s22, [#allocation3]
    $region5: #{policy_net_forward.1} parent=1 // pred_fallthru
      _
    // Predicated region
    $region6: #{policy_net_forward.1} parent=1 // pred_check
      _
    $region7: #{policy_net_forward.1} parent=1 // pred_check_branch
      %26 = sbr.rel (0) target = $region9
    $region8: #{policy_net_forward.1} parent=1 // pred_region
      %s28 = ssub.s32 256, 256
      %29 = vsyncadd [#allocation5], %s28
      %s30 = sshll.u32 [#allocation4], 4
      %s31 = int_to_ptr.vmem [resolvable:$true] %s30
      %36 = dma.hbm_to_vmem [thread:$0]  %s1, 256, %s31, [#allocation5], 128, 128, 8
    $region9: #{policy_net_forward.1} parent=1 // pred_fallthru
      _
    // Predicated region
    $region10: #{policy_net_forward.1} parent=1 // pred_check
      _
    $region11: #{policy_net_forward.1} parent=1 // pred_check_branch
      %38 = sbr.rel (0) target = $region13
    $region12: #{policy_net_forward.1} parent=1 // pred_region
      %s40 = ssub.s32 32, 32
      %41 = vsyncadd [#allocation5], %s40
      %s43 = sshll.u32 [#allocation6], 4
      %s44 = int_to_ptr.vmem [resolvable:$true] %s43
      %46 = dma.hbm_to_vmem [thread:$0]  %s2, 32, %s44, [#allocation5]
    $region13: #{policy_net_forward.1} parent=1 // pred_fallthru
      _
    // Predicated region
    $region14: #{policy_net_forward.1} parent=1 // pred_check
      _
    $region15: #{policy_net_forward.1} parent=1 // pred_check_branch
      %48 = sbr.rel (0) target = $region17
    $region16: #{policy_net_forward.1} parent=1 // pred_region
      %s50 = ssub.s32 4096, 4096
      %51 = vsyncadd [#allocation8], %s50
      %s52 = sshll.u32 [#allocation7], 4
      %s53 = int_to_ptr.vmem [resolvable:$true] %s52
      %58 = dma.hbm_to_vmem [thread:$0]  %s3, 4096, %s53, [#allocation8], 128, 128, 8
    $region17: #{policy_net_forward.1} parent=1 // pred_fallthru
      _
    // Predicated region
    $region18: #{policy_net_forward.1} parent=1 // pred_check
      _
    $region19: #{policy_net_forward.1} parent=1 // pred_check_branch
      %60 = sbr.rel (0) target = $region21
    $region20: #{policy_net_forward.1} parent=1 // pred_region
      _
    $region21: #{policy_net_forward.1} parent=1 // pred_fallthru
      _
    // Predicated region
    $region22: #{policy_net_forward.1} parent=1 // pred_check
      _
    $region23: #{policy_net_forward.1} parent=1 // pred_check_branch
      %62 = sbr.rel (0) target = $region25
    $region24: #{policy_net_forward.1} parent=1 // pred_region
      %s64 = ssub.s32 2048, 2048
      %65 = vsyncadd [#allocation8], %s64
      %s66 = sshll.u32 [#allocation9], 4
      %s67 = int_to_ptr.vmem [resolvable:$true] %s66
      %72 = dma.hbm_to_vmem [thread:$0]  %s5, 2048, %s67, [#allocation8], 64, 64, 4
    $region25: #{policy_net_forward.1} parent=1 // pred_fallthru
      _
    // Predicated region
    $region26: #{policy_net_forward.1} parent=1 // pred_check
      _
    $region27: #{policy_net_forward.1} parent=1 // pred_check_branch
      %74 = sbr.rel (0) target = $region29
    $region28: #{policy_net_forward.1} parent=1 // pred_region
      _
    $region29: #{policy_net_forward.1} parent=1 // pred_fallthru
      _
    // Predicated region
    $region30: #{policy_net_forward.1} parent=1 // pred_check
      _
    $region31: #{policy_net_forward.1} parent=1 // pred_check_branch
      %76 = sbr.rel (0) target = $region33
    $region32: #{policy_net_forward.1} parent=1 // pred_region
      %77 = dma.done [#allocation3], 128
    $region33: #{policy_net_forward.1} parent=1 // pred_fallthru
      _
    // Predicated region
    $region34: #{policy_net_forward.1} parent=1 // pred_check
      _
    $region35: #{policy_net_forward.1} parent=1 // pred_check_branch
      %79 = sbr.rel (0) target = $region37
    $region36: #{policy_net_forward.1} parent=1 // pred_region
      %80 = dma.done [#allocation5], 256
    $region37: #{policy_net_forward.1} parent=1 // pred_fallthru
      _
    // Predicated region
    $region38: #{policy_net_forward.1} parent=1 // pred_check
      _
    $region39: #{policy_net_forward.1} parent=1 // pred_check_branch
      %82 = sbr.rel (0) target = $region41
    $region40: #{policy_net_forward.1} parent=1 // pred_region
      %83 = dma.done [#allocation5], 32
    $region41: #{policy_net_forward.1} parent=1 // pred_fallthru
      _
    // Predicated region
    $region42: #{policy_net_forward.1} parent=1 // pred_check
      _
    $region43: #{policy_net_forward.1} parent=1 // pred_check_branch
      %85 = sbr.rel (0) target = $region45
    $region44: #{policy_net_forward.1} parent=1 // pred_region
      %86 = dma.done [#allocation8], 4096
    $region45: #{policy_net_forward.1} parent=1 // pred_fallthru
      _
    // Predicated region
    $region46: #{policy_net_forward.1} parent=1 // pred_check
      _
    $region47: #{policy_net_forward.1} parent=1 // pred_check_branch
      %88 = sbr.rel (0) target = $region49
    $region48: #{policy_net_forward.1} parent=1 // pred_region
      %89 = dma.done [#allocation8], 2048
    $region49: #{policy_net_forward.1} parent=1 // pred_fallthru
      _
    %v91 = vld [vmem:[#allocation2] sm:$0xff]
    %v92 = vpack.c.bf16 %v91, %v91
    %v93 = vld [vmem:[#allocation4] sm:$0xff]
    %v94 = vld [vmem:[#allocation4 + $0x8] sm:$0xff]
    %v95 = vld [vmem:[#allocation6] sm:$0x3]
    %v97 = vlaneseq
    %v98 = vshrl.u32 %v97, 7
    %v99 = vsub.s32 0, %v98
    %v100 = vrot.slane %v95, %v99
    %v101 = vlaneseq
    %v102 = vshrl.u32 %v101, 7
    %v103 = vsub.s32 1, %v102
    %v104 = vrot.slane %v95, %v103
    %v109 = vunpack.c.l.b16 %v93
    %v110 = vunpack.c.h.b16 %v93
    %v111 = vunpack.c.l.b16 %v94
    %v112 = vunpack.c.h.b16 %v94
    %v113 = vpack.c.b16 %v111, %v109
    %v114 = vpack.c.b16 %v112, %v110
    %vm117 = vcmask 130048
    %v119 = vsel %vm117, %v92, 0
    %121 = vmatprep.subr.bf16.mxu0 0
    %122 = vmatpush1.bf16.msra.mxu0 0
    %123 = vmatprep.subr.bf16.mxu0 0
    %124 = vmatpush1.bf16.msra.mxu0 0
    %125 = vmatprep.subr.bf16.mxu0 0
    %126 = vmatpush1.bf16.msra.mxu0 0
    %127 = vmatprep.subr.bf16.mxu0 0
    %128 = vmatpush1.bf16.msra.mxu0 0
    %129 = vmatprep.subr.bf16.mxu0 0
    %130 = vmatpush1.bf16.msra.mxu0 0
    %131 = vmatprep.subr.bf16.mxu0 0
    %132 = vmatpush1.bf16.msra.mxu0 0
    %133 = vmatprep.subr.bf16.mxu0 0
    %134 = vmatpush1.bf16.msra.mxu0 0
    %135 = vmatprep.subr.bf16.mxu0 %v114
    %136 = vmatpush1.bf16.msra.mxu0 %v113
    %137 = vmatprep.subr.bf16.mxu0 0
    %138 = vmatpush2.bf16.msra.mxu0 0
    %139 = vmatprep.subr.bf16.mxu0 0
    %140 = vmatpush2.bf16.msra.mxu0 0
    %141 = vmatprep.subr.bf16.mxu0 0
    %142 = vmatpush2.bf16.msra.mxu0 0
    %143 = vmatprep.subr.bf16.mxu0 0
    %144 = vmatpush2.bf16.msra.mxu0 0
    %145 = vmatprep.subr.bf16.mxu0 0
    %146 = vmatpush2.bf16.msra.mxu0 0
    %147 = vmatprep.subr.bf16.mxu0 0
    %148 = vmatpush2.bf16.msra.mxu0 0
    %149 = vmatprep.subr.bf16.mxu0 0
    %150 = vmatpush2.bf16.msra.mxu0 0
    %151 = vmatprep.subr.bf16.mxu0 0
    %152 = vmatpush2.bf16.msra.mxu0 0
    %153 = vmatprep.mubr.bf16.mxu0 0
    %154 = vmatmul.mubr.bf16.gmra.mxu0 %v119
    %v155 = vpop.f32.mrf.mxu0
    %v156 = vadd.f32 %v100, %v155
    %v157 = vpop.f32.mrf.mxu0
    %v158 = vadd.f32 %v104, %v157
    %v159 = vpop.f32.mrf.mxu0
    %v160 = vpop.f32.mrf.mxu0
    %161 = vdwg.mxu0
    %v162 = vmax.f32 %v156, 0.0
    %v163 = vmax.f32 %v158, 0.0
    %v164 = vpack.c.bf16 %v162, %v162
    %v165 = vpack.c.bf16 %v163, %v163
    %v166 = vld [vmem:[#allocation7] sm:$0xff]
    %v167 = vld [vmem:[#allocation7 + $0x8] sm:$0xff]
    %v168 = vld [vmem:[#allocation7 + $0x10] sm:$0xff]
    %v169 = vld [vmem:[#allocation7 + $0x18] sm:$0xff]
    %v170 = vld [vmem:[#allocation7 + $0x20] sm:$0xff]
    %v171 = vld [vmem:[#allocation7 + $0x28] sm:$0xff]
    %v172 = vld [vmem:[#allocation7 + $0x30] sm:$0xff]
    %v173 = vld [vmem:[#allocation7 + $0x38] sm:$0xff]
    %v174 = vld [vmem:[#allocation7 + $0x40] sm:$0xff]
    %v175 = vld [vmem:[#allocation7 + $0x48] sm:$0xff]
    %v176 = vld [vmem:[#allocation7 + $0x50] sm:$0xff]
    %v177 = vld [vmem:[#allocation7 + $0x58] sm:$0xff]
    %v178 = vld [vmem:[#allocation7 + $0x60] sm:$0xff]
    %v179 = vld [vmem:[#allocation7 + $0x68] sm:$0xff]
    %v180 = vld [vmem:[#allocation7 + $0x70] sm:$0xff]
    %v181 = vld [vmem:[#allocation7 + $0x78] sm:$0xff]
    %v182 = vld [vmem:[#allocation7 + $0x80] sm:$0xff]
    %v183 = vld [vmem:[#allocation7 + $0x88] sm:$0xff]
    %v184 = vld [vmem:[#allocation7 + $0x90] sm:$0xff]
    %v185 = vld [vmem:[#allocation7 + $0x98] sm:$0xff]
    %v186 = vld [vmem:[#allocation7 + $0xa0] sm:$0xff]
    %v187 = vld [vmem:[#allocation7 + $0xa8] sm:$0xff]
    %v188 = vld [vmem:[#allocation7 + $0xb0] sm:$0xff]
    %v189 = vld [vmem:[#allocation7 + $0xb8] sm:$0xff]
    %v190 = vld [vmem:[#allocation7 + $0xc0] sm:$0xff]
    %v191 = vld [vmem:[#allocation7 + $0xc8] sm:$0xff]
    %v192 = vld [vmem:[#allocation7 + $0xd0] sm:$0xff]
    %v193 = vld [vmem:[#allocation7 + $0xd8] sm:$0xff]
    %v194 = vld [vmem:[#allocation7 + $0xe0] sm:$0xff]
    %v195 = vld [vmem:[#allocation7 + $0xe8] sm:$0xff]
    %v196 = vld [vmem:[#allocation7 + $0xf0] sm:$0xff]
    %v197 = vld [vmem:[#allocation7 + $0xf8] sm:$0xff]
    %v198 = vld [vmem:[%s4] sm:$0x3]
    %v200 = vlaneseq
    %v201 = vshrl.u32 %v200, 7
    %v202 = vsub.s32 0, %v201
    %v203 = vrot.slane %v198, %v202
    %v204 = vlaneseq
    %v205 = vshrl.u32 %v204, 7
    %v206 = vsub.s32 1, %v205
    %v207 = vrot.slane %v198, %v206
    %v242 = vunpack.c.l.b16 %v166
    %v243 = vunpack.c.h.b16 %v166
    %v244 = vunpack.c.l.b16 %v167
    %v245 = vunpack.c.h.b16 %v167
    %v246 = vunpack.c.l.b16 %v168
    %v247 = vunpack.c.h.b16 %v168
    %v248 = vunpack.c.l.b16 %v169
    %v249 = vunpack.c.h.b16 %v169
    %v250 = vunpack.c.l.b16 %v170
    %v251 = vunpack.c.h.b16 %v170
    %v252 = vunpack.c.l.b16 %v171
    %v253 = vunpack.c.h.b16 %v171
    %v254 = vunpack.c.l.b16 %v172
    %v255 = vunpack.c.h.b16 %v172
    %v256 = vunpack.c.l.b16 %v173
    %v257 = vunpack.c.h.b16 %v173
    %v258 = vunpack.c.l.b16 %v174
    %v259 = vunpack.c.h.b16 %v174
    %v260 = vunpack.c.l.b16 %v175
    %v261 = vunpack.c.h.b16 %v175
    %v262 = vunpack.c.l.b16 %v176
    %v263 = vunpack.c.h.b16 %v176
    %v264 = vunpack.c.l.b16 %v177
    %v265 = vunpack.c.h.b16 %v177
    %v266 = vunpack.c.l.b16 %v178
    %v267 = vunpack.c.h.b16 %v178
    %v268 = vunpack.c.l.b16 %v179
    %v269 = vunpack.c.h.b16 %v179
    %v270 = vunpack.c.l.b16 %v180
    %v271 = vunpack.c.h.b16 %v180
    %v272 = vunpack.c.l.b16 %v181
    %v273 = vunpack.c.h.b16 %v181
    %v274 = vunpack.c.l.b16 %v182
    %v275 = vunpack.c.h.b16 %v182
    %v276 = vunpack.c.l.b16 %v183
    %v277 = vunpack.c.h.b16 %v183
    %v278 = vunpack.c.l.b16 %v184
    %v279 = vunpack.c.h.b16 %v184
    %v280 = vunpack.c.l.b16 %v185
    %v281 = vunpack.c.h.b16 %v185
    %v282 = vunpack.c.l.b16 %v186
    %v283 = vunpack.c.h.b16 %v186
    %v284 = vunpack.c.l.b16 %v187
    %v285 = vunpack.c.h.b16 %v187
    %v286 = vunpack.c.l.b16 %v188
    %v287 = vunpack.c.h.b16 %v188
    %v288 = vunpack.c.l.b16 %v189
    %v289 = vunpack.c.h.b16 %v189
    %v290 = vunpack.c.l.b16 %v190
    %v291 = vunpack.c.h.b16 %v190
    %v292 = vunpack.c.l.b16 %v191
    %v293 = vunpack.c.h.b16 %v191
    %v294 = vunpack.c.l.b16 %v192
    %v295 = vunpack.c.h.b16 %v192
    %v296 = vunpack.c.l.b16 %v193
    %v297 = vunpack.c.h.b16 %v193
    %v298 = vunpack.c.l.b16 %v194
    %v299 = vunpack.c.h.b16 %v194
    %v300 = vunpack.c.l.b16 %v195
    %v301 = vunpack.c.h.b16 %v195
    %v302 = vunpack.c.l.b16 %v196
    %v303 = vunpack.c.h.b16 %v196
    %v304 = vunpack.c.l.b16 %v197
    %v305 = vunpack.c.h.b16 %v197
    %v306 = vpack.c.b16 %v244, %v242
    %v307 = vpack.c.b16 %v245, %v243
    %v308 = vpack.c.b16 %v248, %v246
    %v309 = vpack.c.b16 %v249, %v247
    %v310 = vpack.c.b16 %v252, %v250
    %v311 = vpack.c.b16 %v253, %v251
    %v312 = vpack.c.b16 %v256, %v254
    %v313 = vpack.c.b16 %v257, %v255
    %v314 = vpack.c.b16 %v260, %v258
    %v315 = vpack.c.b16 %v261, %v259
    %v316 = vpack.c.b16 %v264, %v262
    %v317 = vpack.c.b16 %v265, %v263
    %v318 = vpack.c.b16 %v268, %v266
    %v319 = vpack.c.b16 %v269, %v267
    %v320 = vpack.c.b16 %v272, %v270
    %v321 = vpack.c.b16 %v273, %v271
    %v322 = vpack.c.b16 %v276, %v274
    %v323 = vpack.c.b16 %v277, %v275
    %v324 = vpack.c.b16 %v280, %v278
    %v325 = vpack.c.b16 %v281, %v279
    %v326 = vpack.c.b16 %v284, %v282
    %v327 = vpack.c.b16 %v285, %v283
    %v328 = vpack.c.b16 %v288, %v286
    %v329 = vpack.c.b16 %v289, %v287
    %v330 = vpack.c.b16 %v292, %v290
    %v331 = vpack.c.b16 %v293, %v291
    %v332 = vpack.c.b16 %v296, %v294
    %v333 = vpack.c.b16 %v297, %v295
    %v334 = vpack.c.b16 %v300, %v298
    %v335 = vpack.c.b16 %v301, %v299
    %v336 = vpack.c.b16 %v304, %v302
    %v337 = vpack.c.b16 %v305, %v303
    %370 = vmatprep.subr.bf16.mxu0 %v321
    %371 = vmatpush1.bf16.msra.mxu0 %v320
    %372 = vmatprep.subr.bf16.mxu0 %v319
    %373 = vmatpush1.bf16.msra.mxu0 %v318
    %374 = vmatprep.subr.bf16.mxu0 %v317
    %375 = vmatpush1.bf16.msra.mxu0 %v316
    %376 = vmatprep.subr.bf16.mxu0 %v315
    %377 = vmatpush1.bf16.msra.mxu0 %v314
    %378 = vmatprep.subr.bf16.mxu0 %v313
    %379 = vmatpush1.bf16.msra.mxu0 %v312
    %380 = vmatprep.subr.bf16.mxu0 %v311
    %381 = vmatpush1.bf16.msra.mxu0 %v310
    %382 = vmatprep.subr.bf16.mxu0 %v309
    %383 = vmatpush1.bf16.msra.mxu0 %v308
    %384 = vmatprep.subr.bf16.mxu0 %v307
    %385 = vmatpush1.bf16.msra.mxu0 %v306
    %386 = vmatprep.subr.bf16.mxu0 %v337
    %387 = vmatpush2.bf16.msra.mxu0 %v336
    %388 = vmatprep.subr.bf16.mxu0 %v335
    %389 = vmatpush2.bf16.msra.mxu0 %v334
    %390 = vmatprep.subr.bf16.mxu0 %v333
    %391 = vmatpush2.bf16.msra.mxu0 %v332
    %392 = vmatprep.subr.bf16.mxu0 %v331
    %393 = vmatpush2.bf16.msra.mxu0 %v330
    %394 = vmatprep.subr.bf16.mxu0 %v329
    %395 = vmatpush2.bf16.msra.mxu0 %v328
    %396 = vmatprep.subr.bf16.mxu0 %v327
    %397 = vmatpush2.bf16.msra.mxu0 %v326
    %398 = vmatprep.subr.bf16.mxu0 %v325
    %399 = vmatpush2.bf16.msra.mxu0 %v324
    %400 = vmatprep.subr.bf16.mxu0 %v323
    %401 = vmatpush2.bf16.msra.mxu0 %v322
    %402 = vmatprep.mubr.bf16.mxu0 %v165
    %403 = vmatmul.mubr.bf16.gmra.mxu0 %v164
    %v404 = vpop.f32.mrf.mxu0
    %v405 = vadd.f32 %v203, %v404
    %v406 = vpop.f32.mrf.mxu0
    %v407 = vadd.f32 %v207, %v406
    %v408 = vpop.f32.mrf.mxu0
    %v409 = vpop.f32.mrf.mxu0
    %410 = vdwg.mxu0
    %v411 = vmax.f32 %v405, 0.0
    %v412 = vmax.f32 %v407, 0.0
    %v413 = vpack.c.bf16 %v411, %v411
    %v414 = vpack.c.bf16 %v412, %v412
    %v415 = vld [vmem:[#allocation9] sm:$0xf]
    %v416 = vld [vmem:[#allocation9 + $0x4] sm:$0xf]
    %v417 = vld [vmem:[#allocation9 + $0x8] sm:$0xf]
    %v418 = vld [vmem:[#allocation9 + $0xc] sm:$0xf]
    %v419 = vld [vmem:[#allocation9 + $0x10] sm:$0xf]
    %v420 = vld [vmem:[#allocation9 + $0x14] sm:$0xf]
    %v421 = vld [vmem:[#allocation9 + $0x18] sm:$0xf]
    %v422 = vld [vmem:[#allocation9 + $0x1c] sm:$0xf]
    %v423 = vld [vmem:[#allocation9 + $0x20] sm:$0xf]
    %v424 = vld [vmem:[#allocation9 + $0x24] sm:$0xf]
    %v425 = vld [vmem:[#allocation9 + $0x28] sm:$0xf]
    %v426 = vld [vmem:[#allocation9 + $0x2c] sm:$0xf]
    %v427 = vld [vmem:[#allocation9 + $0x30] sm:$0xf]
    %v428 = vld [vmem:[#allocation9 + $0x34] sm:$0xf]
    %v429 = vld [vmem:[#allocation9 + $0x38] sm:$0xf]
    %v430 = vld [vmem:[#allocation9 + $0x3c] sm:$0xf]
    %v431 = vld [vmem:[#allocation9 + $0x40] sm:$0xf]
    %v432 = vld [vmem:[#allocation9 + $0x44] sm:$0xf]
    %v433 = vld [vmem:[#allocation9 + $0x48] sm:$0xf]
    %v434 = vld [vmem:[#allocation9 + $0x4c] sm:$0xf]
    %v435 = vld [vmem:[#allocation9 + $0x50] sm:$0xf]
    %v436 = vld [vmem:[#allocation9 + $0x54] sm:$0xf]
    %v437 = vld [vmem:[#allocation9 + $0x58] sm:$0xf]
    %v438 = vld [vmem:[#allocation9 + $0x5c] sm:$0xf]
    %v439 = vld [vmem:[#allocation9 + $0x60] sm:$0xf]
    %v440 = vld [vmem:[#allocation9 + $0x64] sm:$0xf]
    %v441 = vld [vmem:[#allocation9 + $0x68] sm:$0xf]
    %v442 = vld [vmem:[#allocation9 + $0x6c] sm:$0xf]
    %v443 = vld [vmem:[#allocation9 + $0x70] sm:$0xf]
    %v444 = vld [vmem:[#allocation9 + $0x74] sm:$0xf]
    %v445 = vld [vmem:[#allocation9 + $0x78] sm:$0xf]
    %v446 = vld [vmem:[#allocation9 + $0x7c] sm:$0xf]
    %v447 = vld [vmem:[%s6] sm:$0x1]
    %v449 = vlaneseq
    %v450 = vshrl.u32 %v449, 7
    %v451 = vsub.s32 0, %v450
    %v452 = vrot.slane %v447, %v451
    %v486 = vunpack.c.l.b16 %v415
    %v487 = vunpack.c.l.b16 %v416
    %v488 = vunpack.c.l.b16 %v417
    %v489 = vunpack.c.l.b16 %v418
    %v490 = vunpack.c.l.b16 %v419
    %v491 = vunpack.c.l.b16 %v420
    %v492 = vunpack.c.l.b16 %v421
    %v493 = vunpack.c.l.b16 %v422
    %v494 = vunpack.c.l.b16 %v423
    %v495 = vunpack.c.l.b16 %v424
    %v496 = vunpack.c.l.b16 %v425
    %v497 = vunpack.c.l.b16 %v426
    %v498 = vunpack.c.l.b16 %v427
    %v499 = vunpack.c.l.b16 %v428
    %v500 = vunpack.c.l.b16 %v429
    %v501 = vunpack.c.l.b16 %v430
    %v502 = vunpack.c.l.b16 %v431
    %v503 = vunpack.c.l.b16 %v432
    %v504 = vunpack.c.l.b16 %v433
    %v505 = vunpack.c.l.b16 %v434
    %v506 = vunpack.c.l.b16 %v435
    %v507 = vunpack.c.l.b16 %v436
    %v508 = vunpack.c.l.b16 %v437
    %v509 = vunpack.c.l.b16 %v438
    %v510 = vunpack.c.l.b16 %v439
    %v511 = vunpack.c.l.b16 %v440
    %v512 = vunpack.c.l.b16 %v441
    %v513 = vunpack.c.l.b16 %v442
    %v514 = vunpack.c.l.b16 %v443
    %v515 = vunpack.c.l.b16 %v444
    %v516 = vunpack.c.l.b16 %v445
    %v517 = vunpack.c.l.b16 %v446
    %v518 = vpack.c.b16 %v487, %v486
    %v519 = vpack.c.b16 %v489, %v488
    %v520 = vpack.c.b16 %v491, %v490
    %v521 = vpack.c.b16 %v493, %v492
    %v522 = vpack.c.b16 %v495, %v494
    %v523 = vpack.c.b16 %v497, %v496
    %v524 = vpack.c.b16 %v499, %v498
    %v525 = vpack.c.b16 %v501, %v500
    %v526 = vpack.c.b16 %v503, %v502
    %v527 = vpack.c.b16 %v505, %v504
    %v528 = vpack.c.b16 %v507, %v506
    %v529 = vpack.c.b16 %v509, %v508
    %v530 = vpack.c.b16 %v511, %v510
    %v531 = vpack.c.b16 %v513, %v512
    %v532 = vpack.c.b16 %v515, %v514
    %v533 = vpack.c.b16 %v517, %v516
    %550 = vmatprep.subr.bf16.mxu0 0
    %551 = vmatpush1.bf16.msra.mxu0 %v525
    %552 = vmatprep.subr.bf16.mxu0 0
    %553 = vmatpush1.bf16.msra.mxu0 %v524
    %554 = vmatprep.subr.bf16.mxu0 0
    %555 = vmatpush1.bf16.msra.mxu0 %v523
    %556 = vmatprep.subr.bf16.mxu0 0
    %557 = vmatpush1.bf16.msra.mxu0 %v522
    %558 = vmatprep.subr.bf16.mxu0 0
    %559 = vmatpush1.bf16.msra.mxu0 %v521
    %560 = vmatprep.subr.bf16.mxu0 0
    %561 = vmatpush1.bf16.msra.mxu0 %v520
    %562 = vmatprep.subr.bf16.mxu0 0
    %563 = vmatpush1.bf16.msra.mxu0 %v519
    %564 = vmatprep.subr.bf16.mxu0 0
    %565 = vmatpush1.bf16.msra.mxu0 %v518
    %566 = vmatprep.subr.bf16.mxu0 0
    %567 = vmatpush2.bf16.msra.mxu0 %v533
    %568 = vmatprep.subr.bf16.mxu0 0
    %569 = vmatpush2.bf16.msra.mxu0 %v532
    %570 = vmatprep.subr.bf16.mxu0 0
    %571 = vmatpush2.bf16.msra.mxu0 %v531
    %572 = vmatprep.subr.bf16.mxu0 0
    %573 = vmatpush2.bf16.msra.mxu0 %v530
    %574 = vmatprep.subr.bf16.mxu0 0
    %575 = vmatpush2.bf16.msra.mxu0 %v529
    %576 = vmatprep.subr.bf16.mxu0 0
    %577 = vmatpush2.bf16.msra.mxu0 %v528
    %578 = vmatprep.subr.bf16.mxu0 0
    %579 = vmatpush2.bf16.msra.mxu0 %v527
    %580 = vmatprep.subr.bf16.mxu0 0
    %581 = vmatpush2.bf16.msra.mxu0 %v526
    %582 = vmatprep.mubr.bf16.mxu0 %v414
    %583 = vmatmul.mubr.bf16.gmra.mxu0 %v413
    %v584 = vpop.f32.mrf.mxu0
    %v585 = vadd.f32 %v452, %v584
    %v586 = vpop.f32.mrf.mxu0
    %v587 = vpop.f32.mrf.mxu0
    %v588 = vpop.f32.mrf.mxu0
    %589 = vdwg.mxu0
    %590 = vst [vmem:[%s7] sm:$0xff] %v585
    // Predicated region
    $region50: #{policy_net_forward.1} parent=1 // pred_check
      _
    $region51: #{policy_net_forward.1} parent=1 // pred_check_branch
      %592 = sbr.rel (0) target = $region53
    $region52: #{policy_net_forward.1} parent=1 // pred_region
      _
    $region53: #{policy_net_forward.1} parent=1 // pred_fallthru
      _
    // Predicated region
    $region54: #{policy_net_forward.1} parent=1 // pred_check
      _
    $region55: #{policy_net_forward.1} parent=1 // pred_check_branch
      %594 = sbr.rel (0) target = $region57
    $region56: #{policy_net_forward.1} parent=1 // pred_region
      _
    $region57: #{policy_net_forward.1} parent=1 // pred_fallthru
      _
    %595 = vsyncpa [#allocation3], 1
    %596 = vsyncpa [#allocation5], 1
    %597 = vsyncpa [#allocation8], 1

</llo_original>
